<compile_context>
chip_gen: v5e
topology: v5e:2x2
jax: 0.10.0
libtpu: 0.0.40
codegen_flags: <defaults>
</compile_context>

<pallas_src>
import numpy as np

import jax
import jax.numpy as jnp
from jax.experimental import pallas as pl
from jax.experimental.pallas import tpu as pltpu


_LANE = 128                          # lane width (last-dim tiling unit)
_SUBLANE = 8                         # sublane width (2nd-to-last tiling unit)
_BYTES_BUDGET = 4 * 1024 * 1024      # target bytes per pipelined input buffer
_VMEM_LIMIT = 48 * 1024 * 1024       # scoped VMEM limit (headroom under v7x 64 MiB)
_MAX_BN = 32                         # max samples batched per grid step (unrolled)
_FLAT_SINGLE_MAX = 1 << 20           # elements handled by one flat (K, 128) tile
_FLAT_CHUNK = 2048                   # chunk lane width for large dim=None inputs


def _round_up(a, b):
    return (a + b - 1) // b * b


def _lowest_py(dtype):
    """Padding value that can never win an argmax over real data."""
    dtype = np.dtype(dtype)
    if np.issubdtype(dtype, np.floating):
        return float("-inf")
    if dtype == np.bool_:
        return False
    return int(np.iinfo(dtype).min)


def _reduce_max(v, axes):
    for a in sorted(axes, reverse=True):
        v = jnp.max(v, axis=a, keepdims=True)
    return v


def _argmax_mask(x, axes):
    """torch-style argmax candidate mask over `axes` of a tile.

    Returns (cand, mx, any_nan): candidate positions (first NaN if the slice
    has NaN, otherwise positions equal to the max), the NaN-ignoring max, and
    the NaN indicator (None for non-float dtypes).
    """
    if jnp.issubdtype(x.dtype, jnp.floating):
        nan = jnp.isnan(x)
        xc = jnp.where(nan, jnp.array(-jnp.inf, dtype=x.dtype), x)
        mx = _reduce_max(xc, axes)
        any_nan = _reduce_max(nan.astype(jnp.float32), axes) > 0.0
        cand = nan | ((xc == mx) & jnp.logical_not(any_nan))
        return cand, mx, any_nan
    mx = _reduce_max(x, axes)
    return x == mx, mx, None


# ---------------------------------------------------------------------------
# Kernels
# ---------------------------------------------------------------------------
def _argmax_mid_kernel(x_ref, o_ref):
    # x_ref: (BN, C, TM); o_ref: (BN, 1, TM).  BN is small (<= 32) -> static
    # unroll so every op stays on well-supported 2-D (sublane, lane) tiles.
    bn, c, _ = x_ref.shape
    for b in range(bn):
        x = x_ref[b]                                           # (C, TM)
        cand, _, _ = _argmax_mask(x, (0,))
        ci = jax.lax.broadcasted_iota(jnp.int32, x.shape, 0)
        idx = jnp.min(jnp.where(cand, ci, jnp.int32(c)), axis=0, keepdims=True)
        o_ref[b] = idx                                         # (1, TM)


def _argmax_last_kernel(x_ref, idx_ref, val_ref):
    # x_ref: (RB, Cp); idx_ref/val_ref: (RB, 1).  Reduction over the lane axis.
    x = x_ref[...]
    cp = x.shape[1]
    cand, mx, any_nan = _argmax_mask(x, (1,))
    ci = jax.lax.broadcasted_iota(jnp.int32, x.shape, 1)
    idx_ref[...] = jnp.min(jnp.where(cand, ci, jnp.int32(cp)), axis=1, keepdims=True)
    if any_nan is not None:
        mx = jnp.where(any_nan, jnp.array(jnp.nan, dtype=x.dtype), mx)
    val_ref[...] = mx.astype(val_ref.dtype)


def _argmax_flat_kernel(x_ref, o_ref):
    # x_ref: (K, 128); o_ref: (1, 1).  Global argmax of a lane-dense tile.
    x = x_ref[...]
    k, w = x.shape
    cand, _, _ = _argmax_mask(x, (0, 1))
    flat = (jax.lax.broadcasted_iota(jnp.int32, x.shape, 0) * w
            + jax.lax.broadcasted_iota(jnp.int32, x.shape, 1))
    masked = jnp.where(cand, flat, jnp.int32(k * w))
    o_ref[...] = jnp.min(jnp.min(masked, axis=1, keepdims=True),
                         axis=0, keepdims=True)


# ---------------------------------------------------------------------------
# pallas_call wrappers
# ---------------------------------------------------------------------------
def _compiler_params(semantics):
    return pltpu.CompilerParams(dimension_semantics=semantics,
                                vmem_limit_bytes=_VMEM_LIMIT)


def _argmax_mid_core(x3, bn, tm):
    n_p, c, m_p = x3.shape
    return pl.pallas_call(
        _argmax_mid_kernel,
        out_shape=jax.ShapeDtypeStruct((n_p, 1, m_p), jnp.int32),
        grid_spec=pltpu.PrefetchScalarGridSpec(
            num_scalar_prefetch=0,
            grid=(n_p // bn, m_p // tm),
            in_specs=[pl.BlockSpec((bn, c, tm), lambda i, j: (i, 0, j))],
            out_specs=pl.BlockSpec((bn, 1, tm), lambda i, j: (i, 0, j)),
        ),
        compiler_params=_compiler_params(("parallel", "parallel")),
    )(x3)


def _argmax_last_core(x2, rb):
    r_p, c_p = x2.shape
    return pl.pallas_call(
        _argmax_last_kernel,
        out_shape=(jax.ShapeDtypeStruct((r_p, 1), jnp.int32),
                   jax.ShapeDtypeStruct((r_p, 1), x2.dtype)),
        grid_spec=pltpu.PrefetchScalarGridSpec(
            num_scalar_prefetch=0,
            grid=(r_p // rb,),
            in_specs=[pl.BlockSpec((rb, c_p), lambda i: (i, 0))],
            out_specs=(pl.BlockSpec((rb, 1), lambda i: (i, 0)),
                       pl.BlockSpec((rb, 1), lambda i: (i, 0))),
        ),
        compiler_params=_compiler_params(("parallel",)),
    )(x2)


def _argmax_flat_core(x2):
    k, w = x2.shape
    return pl.pallas_call(
        _argmax_flat_kernel,
        out_shape=jax.ShapeDtypeStruct((1, 1), jnp.int32),
        grid_spec=pltpu.PrefetchScalarGridSpec(
            num_scalar_prefetch=0,
            grid=(1,),
            in_specs=[pl.BlockSpec((k, w), lambda i: (0, 0))],
            out_specs=pl.BlockSpec((1, 1), lambda i: (0, 0)),
        ),
        compiler_params=_compiler_params(("arbitrary",)),
    )(x2)


# ---------------------------------------------------------------------------
# Host-side tiling / padding logic
# ---------------------------------------------------------------------------
def _argmax_mid(x3):
    """x3: (N, C, M) -> (N, M) int32 argmax over axis 1."""
    n, c, m = x3.shape
    itemsize = np.dtype(x3.dtype).itemsize
    # Lane tile TM: multiple of 128, close to the byte budget, balanced so
    # lane padding waste stays small.
    m128 = _round_up(m, _LANE)
    tm_budget = max(_LANE, (_BYTES_BUDGET // max(1, c * itemsize)) // _LANE * _LANE)
    if tm_budget >= m128:
        tm = m128
    else:
        g = -(-m128 // tm_budget)
        tm = _round_up(-(-m128 // g), _LANE)
    m_p = _round_up(m, tm)
    # Batch samples along N when the full-M block is small, to amortize the
    # per-grid-step overhead (the kernel unrolls over BN).
    if tm == m_p:
        bn = max(1, min(n, _MAX_BN, _BYTES_BUDGET // max(1, c * m_p * itemsize)))
    else:
        bn = 1
    n_p = _round_up(n, bn)
    if n_p != n or m_p != m:
        x3 = jnp.pad(x3, ((0, n_p - n), (0, 0), (0, m_p - m)))
    out = _argmax_mid_core(x3, bn, tm)           # (n_p, 1, m_p)
    return out[:n, 0, :m]


def _rowwise_argmax(x2):
    """x2: (R, C) -> (idx (R,), val (R,)): torch-style argmax/max over the last axis."""
    r, c = x2.shape
    itemsize = np.dtype(x2.dtype).itemsize
    c_p = _round_up(c, _LANE)
    r8 = _round_up(r, _SUBLANE)
    rb_budget = max(_SUBLANE,
                    (_BYTES_BUDGET // max(1, c_p * itemsize)) // _SUBLANE * _SUBLANE)
    if rb_budget >= r8:
        rb = r8
    else:
        g = -(-r8 // rb_budget)
        rb = _round_up(-(-r8 // g), _SUBLANE)
    r_p = _round_up(r, rb)
    if r_p != r or c_p != c:
        x2 = jnp.pad(x2, ((0, r_p - r), (0, c_p - c)),
                     constant_values=_lowest_py(x2.dtype))
    idx, val = _argmax_last_core(x2, rb)
    return idx[:r, 0], val[:r, 0]


def _flat_argmax(flat):
    """flat: (total,) -> () int32, torch.argmax over the flattened array."""
    total = flat.shape[0]
    if total <= _FLAT_SINGLE_MAX:
        k = _round_up(_round_up(total, _LANE) // _LANE, _SUBLANE)
        pad = k * _LANE - total
        if pad:
            flat = jnp.pad(flat, (0, pad), constant_values=_lowest_py(flat.dtype))
        return _argmax_flat_core(flat.reshape(k, _LANE))[0, 0]
    # Large input: lane-dense per-chunk argmax, then reduce the tiny chunk maxima.
    w = _FLAT_CHUNK
    r = -(-total // w)
    pad = r * w - total
    if pad:
        flat = jnp.pad(flat, (0, pad), constant_values=_lowest_py(flat.dtype))
    idx, val = _rowwise_argmax(flat.reshape(r, w))
    win = _flat_argmax(val)                      # chunk that holds the global max
    return idx[win] + win * jnp.int32(w)


def argmax_pallas(x, dim=None):
    """Equivalent of torch.argmax(x, dim=dim); indices returned as int32."""
    x = jnp.asarray(x)
    if dim is None:
        return _flat_argmax(x.reshape(-1))
    dim = dim % x.ndim
    c = x.shape[dim]
    pre = x.shape[:dim]
    post = x.shape[dim + 1:]
    if len(post) == 0:
        # Reduction over the last (lane) axis.
        r = int(np.prod(pre)) if pre else 1
        idx, _ = _rowwise_argmax(x.reshape(r, c))
        return idx.reshape(pre)
    n = int(np.prod(pre)) if pre else 1
    m = int(np.prod(post))
    out = _argmax_mid(x.reshape(n, c, m))        # (n, m)
    return out.reshape(pre + post)


class ArgMax:
    """Mirror of the PyTorch ArgMax module (no parameters)."""

    def __init__(self, dim=None):
        self.dim = dim

    def __call__(self, x):
        return argmax_pallas(x, dim=self.dim)


if __name__ == "__main__":
    key = jax.random.PRNGKey(0)
    x = jax.random.normal(key, (2, 4, 16, 16), dtype=jnp.float32)

    # dim=1: channel argmax over NCHW logits (the module's typical use).
    out1 = jax.block_until_ready(ArgMax(dim=1)(x))
    ref1 = jnp.argmax(x, axis=1).astype(jnp.int32)
    assert out1.shape == (2, 16, 16), out1.shape
    assert bool(jnp.all(out1 == ref1)), "dim=1 mismatch vs jnp.argmax"

    # dim=-1: last-axis (lane-reduction) kernel.
    out2 = jax.block_until_ready(ArgMax(dim=-1)(x))
    ref2 = jnp.argmax(x, axis=-1).astype(jnp.int32)
    assert out2.shape == (2, 4, 16), out2.shape
    assert bool(jnp.all(out2 == ref2)), "dim=-1 mismatch vs jnp.argmax"

    # dim=None: global argmax via the lane-dense flat kernel.
    out3 = jax.block_until_ready(ArgMax()(x))
    ref3 = jnp.argmax(x).astype(jnp.int32)
    assert out3.shape == (), out3.shape
    assert int(out3) == int(ref3), "dim=None mismatch vs jnp.argmax"

    # NaN tie-break matches torch/numpy: index of the first NaN in the slice.
    xn = x.at[1, 2, 3, 5].set(jnp.nan).at[1, 3, 3, 5].set(jnp.nan)
    outn = jax.block_until_ready(ArgMax(dim=1)(xn))
    refn = jnp.asarray(np.argmax(np.asarray(xn), axis=1).astype(np.int32))
    assert bool(jnp.all(outn == refn)), "NaN handling mismatch vs numpy argmax"

    print("KERNEL_OK")
</pallas_src>

<mosaic_0001>
module attributes {stable_mosaic.version = 11 : i64} {
  func.func @_argmax_mid_kernel(%arg0: i32, %arg1: i32, %arg2: memref<2x4x256xf32, #tpu.memory_space<vmem>>, %arg3: memref<2x1x256xi32, #tpu.memory_space<vmem>>) attributes {dimension_semantics = [#tpu.dimension_semantics<parallel>, #tpu.dimension_semantics<parallel>], iteration_bounds = array<i64: 1, 1>, scalar_prefetch = 0 : i64, scratch_operands = 0 : i64, tpu.core_type = #tpu.core_type<tc>, window_params = [{transform_indices = @transform_0, window_bounds = array<i64: 2, 4, 256>}, {transform_indices = @transform_1, window_bounds = array<i64: 2, 1, 256>}]} {
    %c0 = arith.constant 0 : index
    %c0_0 = arith.constant 0 : index
    %c0_1 = arith.constant 0 : index
    %0 = vector.load %arg2[%c0, %c0_0, %c0_1] : memref<2x4x256xf32, #tpu.memory_space<vmem>>, vector<1x4x256xf32>
    %1 = vector.shape_cast %0 : vector<1x4x256xf32> to vector<4x256xf32>
    %2 = arith.cmpf one, %1, %1 : vector<4x256xf32>
    %cst = arith.constant 0xFF800000 : f32
    %3 = vector.broadcast %cst : f32 to vector<4x256xf32>
    %4 = arith.select %2, %3, %1 : vector<4x256xi1>, vector<4x256xf32>
    %cst_2 = arith.constant dense<0xFF800000> : vector<256xf32>
    %5 = vector.multi_reduction <maximumf>, %4, %cst_2 [0] : vector<4x256xf32> to vector<256xf32>
    %6 = vector.shape_cast %5 : vector<256xf32> to vector<1x256xf32>
    %7 = arith.extui %2 : vector<4x256xi1> to vector<4x256xi32>
    %8 = arith.sitofp %7 : vector<4x256xi32> to vector<4x256xf32>
    %cst_3 = arith.constant dense<0xFF800000> : vector<256xf32>
    %9 = vector.multi_reduction <maximumf>, %8, %cst_3 [0] : vector<4x256xf32> to vector<256xf32>
    %10 = vector.shape_cast %9 : vector<256xf32> to vector<1x256xf32>
    %cst_4 = arith.constant 0.000000e+00 : f32
    %11 = vector.broadcast %cst_4 : f32 to vector<1x256xf32>
    %12 = arith.cmpf ogt, %10, %11 : vector<1x256xf32>
    %13 = vector.broadcast %6 : vector<1x256xf32> to vector<4x256xf32>
    %14 = arith.cmpf oeq, %4, %13 : vector<4x256xf32>
    %cst_5 = arith.constant dense<true> : vector<1x256xi1>
    %15 = arith.xori %12, %cst_5 : vector<1x256xi1>
    %16 = vector.broadcast %15 : vector<1x256xi1> to vector<4x256xi1>
    %17 = arith.andi %14, %16 : vector<4x256xi1>
    %18 = arith.ori %2, %17 : vector<4x256xi1>
    %19 = tpu.iota {dimensions = array<i32: 0>} : vector<4x256xi32>
    %c4_i32 = arith.constant 4 : i32
    %20 = vector.broadcast %c4_i32 : i32 to vector<4x256xi32>
    %21 = arith.select %18, %19, %20 : vector<4x256xi1>, vector<4x256xi32>
    %cst_6 = arith.constant dense<2147483647> : vector<256xi32>
    %22 = vector.multi_reduction <minsi>, %21, %cst_6 [0] : vector<4x256xi32> to vector<256xi32>
    %23 = vector.shape_cast %22 : vector<256xi32> to vector<1x256xi32>
    %c0_7 = arith.constant 0 : index
    %c0_8 = arith.constant 0 : index
    %c0_9 = arith.constant 0 : index
    %24 = vector.load %arg3[%c0_7, %c0_8, %c0_9] : memref<2x1x256xi32, #tpu.memory_space<vmem>>, vector<1x1x256xi32>
    %25 = vector.shape_cast %24 : vector<1x1x256xi32> to vector<1x256xi32>
    %26 = vector.shape_cast %23 : vector<1x256xi32> to vector<1x1x256xi32>
    tpu.vector_store %arg3[%c0_7, %c0_8, %c0_9], %26 {strides = array<i32>} : memref<2x1x256xi32, #tpu.memory_space<vmem>>, vector<1x1x256xi32>,
    %c1 = arith.constant 1 : index
    %c0_10 = arith.constant 0 : index
    %c0_11 = arith.constant 0 : index
    %27 = vector.load %arg2[%c1, %c0_10, %c0_11] : memref<2x4x256xf32, #tpu.memory_space<vmem>>, vector<1x4x256xf32>
    %28 = vector.shape_cast %27 : vector<1x4x256xf32> to vector<4x256xf32>
    %29 = arith.cmpf one, %28, %28 : vector<4x256xf32>
    %cst_12 = arith.constant 0xFF800000 : f32
    %30 = vector.broadcast %cst_12 : f32 to vector<4x256xf32>
    %31 = arith.select %29, %30, %28 : vector<4x256xi1>, vector<4x256xf32>
    %cst_13 = arith.constant dense<0xFF800000> : vector<256xf32>
    %32 = vector.multi_reduction <maximumf>, %31, %cst_13 [0] : vector<4x256xf32> to vector<256xf32>
    %33 = vector.shape_cast %32 : vector<256xf32> to vector<1x256xf32>
    %34 = arith.extui %29 : vector<4x256xi1> to vector<4x256xi32>
    %35 = arith.sitofp %34 : vector<4x256xi32> to vector<4x256xf32>
    %cst_14 = arith.constant dense<0xFF800000> : vector<256xf32>
    %36 = vector.multi_reduction <maximumf>, %35, %cst_14 [0] : vector<4x256xf32> to vector<256xf32>
    %37 = vector.shape_cast %36 : vector<256xf32> to vector<1x256xf32>
    %cst_15 = arith.constant 0.000000e+00 : f32
    %38 = vector.broadcast %cst_15 : f32 to vector<1x256xf32>
    %39 = arith.cmpf ogt, %37, %38 : vector<1x256xf32>
    %40 = vector.broadcast %33 : vector<1x256xf32> to vector<4x256xf32>
    %41 = arith.cmpf oeq, %31, %40 : vector<4x256xf32>
    %cst_16 = arith.constant dense<true> : vector<1x256xi1>
    %42 = arith.xori %39, %cst_16 : vector<1x256xi1>
    %43 = vector.broadcast %42 : vector<1x256xi1> to vector<4x256xi1>
    %44 = arith.andi %41, %43 : vector<4x256xi1>
    %45 = arith.ori %29, %44 : vector<4x256xi1>
    %46 = tpu.iota {dimensions = array<i32: 0>} : vector<4x256xi32>
    %c4_i32_17 = arith.constant 4 : i32
    %47 = vector.broadcast %c4_i32_17 : i32 to vector<4x256xi32>
    %48 = arith.select %45, %46, %47 : vector<4x256xi1>, vector<4x256xi32>
    %cst_18 = arith.constant dense<2147483647> : vector<256xi32>
    %49 = vector.multi_reduction <minsi>, %48, %cst_18 [0] : vector<4x256xi32> to vector<256xi32>
    %50 = vector.shape_cast %49 : vector<256xi32> to vector<1x256xi32>
    %c1_19 = arith.constant 1 : index
    %c0_20 = arith.constant 0 : index
    %c0_21 = arith.constant 0 : index
    %51 = vector.load %arg3[%c1_19, %c0_20, %c0_21] : memref<2x1x256xi32, #tpu.memory_space<vmem>>, vector<1x1x256xi32>
    %52 = vector.shape_cast %51 : vector<1x1x256xi32> to vector<1x256xi32>
    %53 = vector.shape_cast %50 : vector<1x256xi32> to vector<1x1x256xi32>
    tpu.vector_store %arg3[%c1_19, %c0_20, %c0_21], %53 {strides = array<i32>} : memref<2x1x256xi32, #tpu.memory_space<vmem>>, vector<1x1x256xi32>,
    return
  }
  func.func @transform_0(%arg0: i32, %arg1: i32) -> (i32, i32, i32) {
    %c0_i32 = arith.constant 0 : i32
    %c0_i32_0 = arith.constant 0 : i32
    return %arg0, %c0_i32, %arg1 : i32, i32, i32
  }
  func.func @transform_1(%arg0: i32, %arg1: i32) -> (i32, i32, i32) {
    %c0_i32 = arith.constant 0 : i32
    %c0_i32_0 = arith.constant 0 : i32
    return %arg0, %c0_i32, %arg1 : i32, i32, i32
  }
}

</mosaic_0001>

<llo_original>
// kernel: tpu_custom_call.1
$region0: #{tpu_custom_call.1}
  #allocation0 [shape = 'u32[]', space=smem, size = 0x4, offset = 0x4, fixed_abs, tag = 'smem constant byte address 0x4 - core index']
  #allocation1 [shape = 'u32[72,128]{1,0:T(1,128)}', space=vmem, size = 0x9000, scoped, tag = 'internal scratch']
  %s0 = inlined_call_operand.hbm [shape: f32[2,4,256], index: 0, kind: input, shape index: {}]
  %s1 = inlined_call_operand.hbm [shape: s32[2,1,256], index: 1, kind: output, shape index: {}]
  %s2 = sld [smem:[#allocation0]]
  $region18: #{tpu_custom_call.1} parent=0
    _
  %s4 = ssub.s32 1, %s2
  %s5 = scalar_select 0, %s4, %s2
  $region1: #{tpu_custom_call.1} parent=0
    #allocation2 [shape = 'u8[8192]{0}', space=vmem, size = 0x2000, scoped, tag = 'input window, operand 0, single buffered']
    #allocation3 [shape = 's32[1]{0}', space=sflag, size = 0x4, scoped, tag = 'scoped memory for tpu_custom_call.1']
    #allocation4 [shape = 's32[1]{0}', space=sflag, size = 0x4, scoped, tag = 'scoped memory for tpu_custom_call.1']
    #allocation5 [shape = 'u8[2048]{0}', space=vmem, size = 0x800, scoped, tag = 'output window, operand 0, single buffered']
    %6 = vsyncpa [#allocation3], 0
    %7 = vsyncpa [#allocation4], 0
    // Predicated region
    $region2: #{tpu_custom_call.1} parent=1 // pred_check
      _
    $region3: #{tpu_custom_call.1} parent=1 // pred_check_branch
      %9 = sbr.rel (0) target = $region5
    $region4: #{tpu_custom_call.1} parent=1 // pred_region
      %11 = vsyncadd [#allocation3], 0
      %s12 = sshll.u32 %s0, 4
      %s13 = int_to_ptr.hbm [resolvable:$true] %s12
      %s14 = sshll.u32 [#allocation2], 4
      %s15 = int_to_ptr.vmem [resolvable:$true] %s14
      %20 = dma.hbm_to_vmem [thread:$0]  %s13, 256, %s15, [#allocation3], 128, 128, 8
    $region5: #{tpu_custom_call.1} parent=1 // pred_fallthru
      _
    // Predicated region
    $region6: #{tpu_custom_call.1} parent=1 // pred_check
      _
    $region7: #{tpu_custom_call.1} parent=1 // pred_check_branch
      %22 = sbr.rel (0) target = $region9
    $region8: #{tpu_custom_call.1} parent=1 // pred_region
      %24 = dma.done [#allocation3], 256
    $region9: #{tpu_custom_call.1} parent=1 // pred_fallthru
      _
    %v25 = vld [vmem:[#allocation2] sm:$0xff]
    %vm26 = vcmp.ne.f32.partialorder %v25, %v25
    %v27 = vsel %vm26, -inf, %v25
    %29 = vst [vmem:[#allocation1] ss:$2 sm:$0xff] %v27
    %v30 = vld.sshfl [vmem:[#allocation1] sm:$0xff pattern:$0x75316420]
    %v31 = vld.sshfl [vmem:[#allocation1 + $0x8] sm:$0xff pattern:$0x75316420]
    %vm34 = vcmask 1043456
    %v35 = vsel %vm34, %v30, -inf
    %v36 = vrot.slane %v35, 4
    %v37 = vmax.f32 %v35, %v36
    %v38 = vrot.slane %v37, 2
    %v39 = vmax.f32 %v37, %v38
    %v40 = vrot.slane %v39, 1
    %v41 = vmax.f32 %v39, %v40
    %v42 = vsel %vm34, %v31, -inf
    %v43 = vrot.slane %v42, 4
    %v44 = vmax.f32 %v42, %v43
    %v45 = vrot.slane %v44, 2
    %v46 = vmax.f32 %v44, %v45
    %v47 = vrot.slane %v46, 1
    %v48 = vmax.f32 %v46, %v47
    %v49 = vsel %vm26, 1, 0
    %v50 = vcvt.s32.f32 %v49
    %52 = vst [vmem:[#allocation1] ss:$2 sm:$0xff] %v50
    %v53 = vld.sshfl [vmem:[#allocation1] sm:$0xff pattern:$0x75316420]
    %v54 = vld.sshfl [vmem:[#allocation1 + $0x8] sm:$0xff pattern:$0x75316420]
    %v57 = vsel %vm34, %v53, -inf
    %v58 = vrot.slane %v57, 4
    %v59 = vmax.f32 %v57, %v58
    %v60 = vrot.slane %v59, 2
    %v61 = vmax.f32 %v59, %v60
    %v62 = vrot.slane %v61, 1
    %v63 = vmax.f32 %v61, %v62
    %v64 = vsel %vm34, %v54, -inf
    %v65 = vrot.slane %v64, 4
    %v66 = vmax.f32 %v64, %v65
    %v67 = vrot.slane %v66, 2
    %v68 = vmax.f32 %v66, %v67
    %v69 = vrot.slane %v68, 1
    %v70 = vmax.f32 %v68, %v69
    %vm71 = vcmp.gt.f32.partialorder %v63, 0.0
    %vm72 = vcmp.gt.f32.partialorder %v70, 0.0
    %v75 = vrot.slane %v48, 4
    %v76 = vsel %vm34, %v41, %v75
    %vm78 = vcmp.eq.f32.partialorder %v27, %v76
    %vm79 = vmxor %vm71, 1
    %vm80 = vmxor %vm72, 1
    %v81 = vsel %vm79, 1, 0
    %v82 = vsel %vm80, 1, 0
    %vm83 = vcmp.eq.s32.totalorder %v81, 1
    %vm84 = vcmp.eq.s32.totalorder %v82, 1
    %v85 = vsel %vm83, 1, 0
    %v86 = vsel %vm84, 1, 0
    %v87 = vrot.slane %v86, 4
    %v88 = vsel %vm34, %v85, %v87
    %vm89 = vcmp.ne.s32.totalorder %v88, 0
    %vm90 = vmand %vm78, %vm89
    %vm91 = vmor %vm26, %vm90
    %v92 = vlaneseq
    %v93 = vshrl.u32 %v92, 7
    %v95 = vunpack.c.l.s4 839922192
    %v96 = vunpack.c.0.s8 %v95
    %v97 = vperm.slane %v93, %v96
    %v98 = vsel %vm91, %v97, 4
    %99 = vst [vmem:[#allocation1] ss:$2 sm:$0xff] %v98
    %v100 = vld.sshfl [vmem:[#allocation1] sm:$0xff pattern:$0x75316420]
    %v101 = vld.sshfl [vmem:[#allocation1 + $0x8] sm:$0xff pattern:$0x75316420]
    %v102 = vsel %vm34, %v100, 2147483647
    %v103 = vrot.slane %v102, 4
    %vm104 = vcmp.lt.s32.totalorder %v102, %v103
    %v105 = vsel %vm104, %v102, %v103
    %v106 = vrot.slane %v105, 2
    %vm107 = vcmp.lt.s32.totalorder %v105, %v106
    %v108 = vsel %vm107, %v105, %v106
    %v109 = vrot.slane %v108, 1
    %vm110 = vcmp.lt.s32.totalorder %v108, %v109
    %v111 = vsel %vm110, %v108, %v109
    %v112 = vsel %vm34, %v101, 2147483647
    %v113 = vrot.slane %v112, 4
    %vm114 = vcmp.lt.s32.totalorder %v112, %v113
    %v115 = vsel %vm114, %v112, %v113
    %v116 = vrot.slane %v115, 2
    %vm117 = vcmp.lt.s32.totalorder %v115, %v116
    %v118 = vsel %vm117, %v115, %v116
    %v119 = vrot.slane %v118, 1
    %vm120 = vcmp.lt.s32.totalorder %v118, %v119
    %v121 = vsel %vm120, %v118, %v119
    %v122 = vrot.slane %v121, 7
    %vm123 = vcmask 1040384
    %v124 = vsel %vm123, %v111, %v122
    %v125 = vlaneseq
    %vm126 = vcmp.ge.s32.totalorder %v125, 0
    %vm127 = vcmp.lt.s32.totalorder %v125, 256
    %vm128 = vmand %vm126, %vm127
    %129 = vst.msk [vmem:[#allocation5] sm:$0x3] %vm128, %v124
    %s130 = scalar_lea.vmem [#allocation2], 8
    %v131 = vld [vmem:[%s130] sm:$0xff]
    %vm132 = vcmp.ne.f32.partialorder %v131, %v131
    %v133 = vsel %vm132, -inf, %v131
    %135 = vst [vmem:[#allocation1] ss:$2 sm:$0xff] %v133
    %v136 = vld.sshfl [vmem:[#allocation1] sm:$0xff pattern:$0x75316420]
    %v137 = vld.sshfl [vmem:[#allocation1 + $0x8] sm:$0xff pattern:$0x75316420]
    %v140 = vsel %vm34, %v136, -inf
    %v141 = vrot.slane %v140, 4
    %v142 = vmax.f32 %v140, %v141
    %v143 = vrot.slane %v142, 2
    %v144 = vmax.f32 %v142, %v143
    %v145 = vrot.slane %v144, 1
    %v146 = vmax.f32 %v144, %v145
    %v147 = vsel %vm34, %v137, -inf
    %v148 = vrot.slane %v147, 4
    %v149 = vmax.f32 %v147, %v148
    %v150 = vrot.slane %v149, 2
    %v151 = vmax.f32 %v149, %v150
    %v152 = vrot.slane %v151, 1
    %v153 = vmax.f32 %v151, %v152
    %v154 = vsel %vm132, 1, 0
    %v155 = vcvt.s32.f32 %v154
    %157 = vst [vmem:[#allocation1] ss:$2 sm:$0xff] %v155
    %v158 = vld.sshfl [vmem:[#allocation1] sm:$0xff pattern:$0x75316420]
    %v159 = vld.sshfl [vmem:[#allocation1 + $0x8] sm:$0xff pattern:$0x75316420]
    %v162 = vsel %vm34, %v158, -inf
    %v163 = vrot.slane %v162, 4
    %v164 = vmax.f32 %v162, %v163
    %v165 = vrot.slane %v164, 2
    %v166 = vmax.f32 %v164, %v165
    %v167 = vrot.slane %v166, 1
    %v168 = vmax.f32 %v166, %v167
    %v169 = vsel %vm34, %v159, -inf
    %v170 = vrot.slane %v169, 4
    %v171 = vmax.f32 %v169, %v170
    %v172 = vrot.slane %v171, 2
    %v173 = vmax.f32 %v171, %v172
    %v174 = vrot.slane %v173, 1
    %v175 = vmax.f32 %v173, %v174
    %vm176 = vcmp.gt.f32.partialorder %v168, 0.0
    %vm177 = vcmp.gt.f32.partialorder %v175, 0.0
    %v180 = vrot.slane %v153, 4
    %v181 = vsel %vm34, %v146, %v180
    %vm183 = vcmp.eq.f32.partialorder %v133, %v181
    %vm184 = vmxor %vm176, 1
    %vm185 = vmxor %vm177, 1
    %v186 = vsel %vm184, 1, 0
    %v187 = vsel %vm185, 1, 0
    %vm188 = vcmp.eq.s32.totalorder %v186, 1
    %vm189 = vcmp.eq.s32.totalorder %v187, 1
    %v190 = vsel %vm188, 1, 0
    %v191 = vsel %vm189, 1, 0
    %v192 = vrot.slane %v191, 4
    %v193 = vsel %vm34, %v190, %v192
    %vm194 = vcmp.ne.s32.totalorder %v193, 0
    %vm195 = vmand %vm183, %vm194
    %vm196 = vmor %vm132, %vm195
    %v197 = vsel %vm196, %v97, 4
    %198 = vst [vmem:[#allocation1] ss:$2 sm:$0xff] %v197
    %v199 = vld.sshfl [vmem:[#allocation1] sm:$0xff pattern:$0x75316420]
    %v200 = vld.sshfl [vmem:[#allocation1 + $0x8] sm:$0xff pattern:$0x75316420]
    %v201 = vsel %vm34, %v199, 2147483647
    %v202 = vrot.slane %v201, 4
    %vm203 = vcmp.lt.s32.totalorder %v201, %v202
    %v204 = vsel %vm203, %v201, %v202
    %v205 = vrot.slane %v204, 2
    %vm206 = vcmp.lt.s32.totalorder %v204, %v205
    %v207 = vsel %vm206, %v204, %v205
    %v208 = vrot.slane %v207, 1
    %vm209 = vcmp.lt.s32.totalorder %v207, %v208
    %v210 = vsel %vm209, %v207, %v208
    %v211 = vsel %vm34, %v200, 2147483647
    %v212 = vrot.slane %v211, 4
    %vm213 = vcmp.lt.s32.totalorder %v211, %v212
    %v214 = vsel %vm213, %v211, %v212
    %v215 = vrot.slane %v214, 2
    %vm216 = vcmp.lt.s32.totalorder %v214, %v215
    %v217 = vsel %vm216, %v214, %v215
    %v218 = vrot.slane %v217, 1
    %vm219 = vcmp.lt.s32.totalorder %v217, %v218
    %v220 = vsel %vm219, %v217, %v218
    %v221 = vrot.slane %v220, 7
    %v222 = vsel %vm123, %v210, %v221
    %s223 = scalar_lea.vmem [#allocation5], 2
    %224 = vst.msk [vmem:[%s223] sm:$0x3] %vm128, %v222
    // Predicated region
    $region10: #{tpu_custom_call.1} parent=1 // pred_check
      _
    $region11: #{tpu_custom_call.1} parent=1 // pred_check_branch
      %226 = sbr.rel (0) target = $region13
    $region12: #{tpu_custom_call.1} parent=1 // pred_region
      %228 = vsyncadd [#allocation4], 0
      %s229 = sshll.u32 [#allocation5], 4
      %s230 = int_to_ptr.vmem [resolvable:$true] %s229
      %s231 = sshll.u32 %s1, 4
      %s232 = int_to_ptr.hbm [resolvable:$true] %s231
      %237 = dma.vmem_to_hbm [thread:$0]  %s230, 64, %s232, [#allocation4], 32, 32, 2
    $region13: #{tpu_custom_call.1} parent=1 // pred_fallthru
      _
    // Predicated region
    $region14: #{tpu_custom_call.1} parent=1 // pred_check
      _
    $region15: #{tpu_custom_call.1} parent=1 // pred_check_branch
      %239 = sbr.rel (0) target = $region17
    $region16: #{tpu_custom_call.1} parent=1 // pred_region
      %241 = dma.done [#allocation4], 64
    $region17: #{tpu_custom_call.1} parent=1 // pred_fallthru
      _
    %242 = vsyncpa [#allocation3], 1
    %243 = vsyncpa [#allocation4], 1

</llo_original>
